<compile_context>
chip_gen: v5e
topology: v5e:2x2
jax: 0.10.0
libtpu: 0.0.40
codegen_flags: <defaults>
</compile_context>

<pallas_src>
import functools

import jax
import jax.numpy as jnp
from jax.experimental import pallas as pl
from jax.experimental.pallas import tpu as pltpu

LANE = 128          # TPU lane width; padded feature dims are multiples of this
NEG_INF = -1e30     # finite "-inf" baked into padded logit lanes (no inf-inf NaNs)


def _round_up(x, m):
    return (x + m - 1) // m * m


def _pick_tile_m(batch):
    """Batch-tile rows: multiple of 128 in [128, 512]; prefer >=4 grid steps."""
    b128 = _round_up(max(batch, 1), 128)
    n128 = b128 // 128
    if n128 <= 2:
        return 128                       # one (or two) minimum-size tiles
    tile_blocks = max(1, min(4, n128 // 4))
    return tile_blocks * 128


def _pick_vmem_limit():
    """Per-generation VMEM budget: ~75% of physical, capped at 100 MiB."""
    phys = None
    try:
        info = pltpu.get_tpu_info()
        for attr in ("vmem_capacity_bytes", "vmem_bytes"):
            v = getattr(info, attr, None)
            if v:
                phys = int(v)
                break
    except Exception:
        phys = None
    if phys is None:
        phys = 64 * 1024 * 1024          # conservative (v7x-sized VMEM)
    return int(min(100 * 1024 * 1024, phys * 3 // 4))


def _mlp_kernel(n_hidden, *refs):
    """refs = (x_ref, W1, b1, W2, b2, ..., Wout, bout, out_ref).

    x and weights are bf16 (MXU inputs); biases are f32 (1, out_pad).
    Accumulation, bias add, ReLU and log_softmax are f32 (v5e-friendly epilogue).
    """
    x_ref = refs[0]
    out_ref = refs[-1]
    p = refs[1:-1]

    h = x_ref[...]                       # bf16 (tile_m, in_dim), straight to MXU

    # Hidden layers: Linear -> ReLU.  Dropout is identity in eval mode.
    for i in range(n_hidden):
        w = p[2 * i][...]                # bf16 (in_pad, out_pad)
        b = p[2 * i + 1][...]            # f32  (1, out_pad)
        a = jnp.dot(h, w, preferred_element_type=jnp.float32) + b
        h = jnp.maximum(a, 0.0).astype(jnp.bfloat16)

    # Output layer (logits).  Padded lanes get NEG_INF via the bias bake
    # (padded W columns are exactly zero), so no per-tile iota/where mask.
    wo = p[2 * n_hidden][...]
    bo = p[2 * n_hidden + 1][...]
    logits = jnp.dot(h, wo, preferred_element_type=jnp.float32) + bo

    # log_softmax along the feature axis (max-stabilized, f32).
    m = jnp.max(logits, axis=-1, keepdims=True)
    shifted = logits - m
    lse = jnp.log(jnp.sum(jnp.exp(shifted), axis=-1, keepdims=True))
    out_ref[...] = (shifted - lse).astype(out_ref.dtype)


def feedforward_network(x, params, *, tile_m=None):
    """x: (B, input_size) f32; params: list of (W, b) with W: (in, out), b: (out,)."""
    batch, input_size = x.shape
    n_hidden = len(params) - 1
    out_size = params[-1][0].shape[1]
    n_layers = len(params)

    if tile_m is None:
        tile_m = _pick_tile_m(batch)

    out_pad = _round_up(out_size, LANE)
    b_pad = _round_up(max(batch, tile_m), tile_m)

    # x: pad batch only; the feature dim keeps its full (unpadded) extent — a
    # block dim equal to the full array dim is exempt from the 128-lane rule.
    x_p = jnp.zeros((b_pad, input_size), jnp.bfloat16).at[:batch, :].set(
        x.astype(jnp.bfloat16))

    flat = []
    flat_specs = []
    prev_pad = input_size                # first-layer K stays unpadded
    for li, (w, b) in enumerate(params):
        fin, fout = w.shape
        is_last = li == n_layers - 1
        fout_pad = out_pad if is_last else _round_up(fout, LANE)
        w_p = jnp.zeros((prev_pad, fout_pad), jnp.float32).at[:fin, :fout].set(w)
        if is_last and fout_pad > fout:
            # Bake the padded-logit mask into the bias (W's padded cols are 0).
            b_p = jnp.full((1, fout_pad), NEG_INF, jnp.float32)
            b_p = b_p.at[:, :fout].set(b.reshape(1, -1))
        else:
            b_p = jnp.zeros((1, fout_pad), jnp.float32).at[:, :fout].set(
                b.reshape(1, -1))
        flat.append(w_p.astype(jnp.bfloat16))        # bf16 at the MXU input
        flat.append(b_p)                             # bias stays f32
        # Weights/biases: full-array blocks, constant index_map -> VMEM-resident.
        flat_specs.append(pl.BlockSpec((prev_pad, fout_pad), lambda i: (0, 0)))
        flat_specs.append(pl.BlockSpec((1, fout_pad), lambda i: (0, 0)))
        prev_pad = fout_pad

    # Advisory cost estimate for the XLA scheduler.
    flops = 2 * b_pad * sum(int(w.shape[0]) * int(w.shape[1]) for w in flat[0::2])
    bytes_accessed = int(
        x_p.size * x_p.dtype.itemsize + b_pad * out_pad * 4
        + sum(int(a.size) * a.dtype.itemsize for a in flat))
    cost = pl.CostEstimate(flops=flops,
                           transcendentals=b_pad * out_pad,
                           bytes_accessed=bytes_accessed)

    grid = (b_pad // tile_m,)
    kernel = functools.partial(_mlp_kernel, n_hidden)

    out_padded = pl.pallas_call(
        kernel,
        out_shape=jax.ShapeDtypeStruct((b_pad, out_pad), jnp.float32),
        grid=grid,
        in_specs=[pl.BlockSpec((tile_m, input_size), lambda i: (i, 0))] + flat_specs,
        out_specs=pl.BlockSpec((tile_m, out_pad), lambda i: (i, 0)),
        compiler_params=pltpu.CompilerParams(
            dimension_semantics=("parallel",),        # batch tiles -> both v7x TCs
            vmem_limit_bytes=_pick_vmem_limit(),      # per-generation budget
        ),
        cost_estimate=cost,
    )(x_p, *flat)

    return out_padded[:batch, :out_size]


def _init_linear(key, fan_in, fan_out):
    """Deterministic PyTorch-style uniform(-1/sqrt(fan_in), 1/sqrt(fan_in)) init."""
    kw, kb = jax.random.split(key)
    bound = 1.0 / jnp.sqrt(jnp.float32(fan_in))
    w = jax.random.uniform(kw, (fan_in, fan_out), jnp.float32, -bound, bound)
    b = jax.random.uniform(kb, (fan_out,), jnp.float32, -bound, bound)
    return w, b


def _reference(x, params):
    """Pure-JAX reference with matching precision (bf16 MXU inputs, f32 accum)."""
    n_hidden = len(params) - 1
    h = x
    for i in range(n_hidden):
        w, b = params[i]
        h = jnp.dot(h.astype(jnp.bfloat16), w.astype(jnp.bfloat16),
                    preferred_element_type=jnp.float32) + b.reshape(1, -1)
        h = jnp.maximum(h, 0.0)
    w, b = params[-1]
    logits = jnp.dot(h.astype(jnp.bfloat16), w.astype(jnp.bfloat16),
                     preferred_element_type=jnp.float32) + b.reshape(1, -1)
    return jax.nn.log_softmax(logits, axis=1)


if __name__ == "__main__":
    # Shapes consistent with FeedforwardNetwork(64, 16, [64, 32]).  batch=512 so
    # the grid has 4 batch tiles (2 per v7x TensorCore) and pipelining is exercised.
    batch = 512
    input_size = 64
    hidden_layers = [64, 32]
    output_size = 16

    key = jax.random.PRNGKey(0)
    keys = jax.random.split(key, len(hidden_layers) + 2)

    params = []
    sizes = [input_size] + hidden_layers
    for i, (fin, fout) in enumerate(zip(sizes[:-1], sizes[1:])):
        params.append(_init_linear(keys[i], fin, fout))
    params.append(_init_linear(keys[len(hidden_layers)],
                               hidden_layers[-1], output_size))

    x = jax.random.normal(keys[-1], (batch, input_size), jnp.float32)

    out = feedforward_network(x, params)
    out = jax.block_until_ready(out)

    ref = _reference(x, params)
    assert out.shape == (batch, output_size), out.shape
    assert jnp.allclose(out, ref, atol=1e-3, rtol=1e-3), "mismatch vs JAX reference"

    print("KERNEL_OK")
</pallas_src>

<mosaic_0001>
module attributes {stable_mosaic.version = 11 : i64} {
  func.func @_mlp_kernel(%arg0: i32, %arg1: memref<128x64xbf16, #tpu.memory_space<vmem>>, %arg2: memref<64x128xbf16, #tpu.memory_space<vmem>>, %arg3: memref<1x128xf32, #tpu.memory_space<vmem>>, %arg4: memref<128x128xbf16, #tpu.memory_space<vmem>>, %arg5: memref<1x128xf32, #tpu.memory_space<vmem>>, %arg6: memref<128x128xbf16, #tpu.memory_space<vmem>>, %arg7: memref<1x128xf32, #tpu.memory_space<vmem>>, %arg8: memref<128x128xf32, #tpu.memory_space<vmem>>) attributes {dimension_semantics = [#tpu.dimension_semantics<parallel>], iteration_bounds = array<i64: 4>, scalar_prefetch = 0 : i64, scratch_operands = 0 : i64, tpu.core_type = #tpu.core_type<tc>, window_params = [{transform_indices = @transform_0, window_bounds = array<i64: 128, 64>}, {pipeline_mode = #tpu.pipeline_mode<synchronous>, transform_indices = @transform_1, window_bounds = array<i64: 64, 128>}, {pipeline_mode = #tpu.pipeline_mode<synchronous>, transform_indices = @transform_2, window_bounds = array<i64: 1, 128>}, {pipeline_mode = #tpu.pipeline_mode<synchronous>, transform_indices = @transform_3, window_bounds = array<i64: 128, 128>}, {pipeline_mode = #tpu.pipeline_mode<synchronous>, transform_indices = @transform_4, window_bounds = array<i64: 1, 128>}, {pipeline_mode = #tpu.pipeline_mode<synchronous>, transform_indices = @transform_5, window_bounds = array<i64: 128, 128>}, {pipeline_mode = #tpu.pipeline_mode<synchronous>, transform_indices = @transform_6, window_bounds = array<i64: 1, 128>}, {transform_indices = @transform_7, window_bounds = array<i64: 128, 128>}]} {
    %c0 = arith.constant 0 : index
    %c0_0 = arith.constant 0 : index
    %0 = vector.load %arg1[%c0, %c0_0] : memref<128x64xbf16, #tpu.memory_space<vmem>>, vector<128x64xbf16>
    %c0_1 = arith.constant 0 : index
    %c0_2 = arith.constant 0 : index
    %1 = vector.load %arg2[%c0_1, %c0_2] : memref<64x128xbf16, #tpu.memory_space<vmem>>, vector<64x128xbf16>
    %c0_3 = arith.constant 0 : index
    %c0_4 = arith.constant 0 : index
    %2 = vector.load %arg3[%c0_3, %c0_4] : memref<1x128xf32, #tpu.memory_space<vmem>>, vector<1x128xf32>
    %cst = arith.constant dense<0.000000e+00> : vector<128x128xf32>
    %3 = tpu.matmul %0, %1, %cst {dimension_numbers = #tpu.dot_dimension_numbers<[1], [0], [0], [1], [0, 0, 1, 1], [], []>} : vector<128x64xbf16>, vector<64x128xbf16>, vector<128x128xf32> -> vector<128x128xf32>
    %4 = vector.broadcast %2 : vector<1x128xf32> to vector<128x128xf32>
    %5 = arith.addf %3, %4 : vector<128x128xf32>
    %cst_5 = arith.constant 0.000000e+00 : f32
    %6 = vector.broadcast %cst_5 : f32 to vector<128x128xf32>
    %7 = arith.maximumf %5, %6 : vector<128x128xf32>
    %8 = arith.truncf %7 : vector<128x128xf32> to vector<128x128xbf16>
    %c0_6 = arith.constant 0 : index
    %c0_7 = arith.constant 0 : index
    %9 = vector.load %arg4[%c0_6, %c0_7] : memref<128x128xbf16, #tpu.memory_space<vmem>>, vector<128x128xbf16>
    %c0_8 = arith.constant 0 : index
    %c0_9 = arith.constant 0 : index
    %10 = vector.load %arg5[%c0_8, %c0_9] : memref<1x128xf32, #tpu.memory_space<vmem>>, vector<1x128xf32>
    %cst_10 = arith.constant dense<0.000000e+00> : vector<128x128xf32>
    %11 = tpu.matmul %8, %9, %cst_10 {dimension_numbers = #tpu.dot_dimension_numbers<[1], [0], [0], [1], [0, 0, 1, 1], [], []>} : vector<128x128xbf16>, vector<128x128xbf16>, vector<128x128xf32> -> vector<128x128xf32>
    %12 = vector.broadcast %10 : vector<1x128xf32> to vector<128x128xf32>
    %13 = arith.addf %11, %12 : vector<128x128xf32>
    %cst_11 = arith.constant 0.000000e+00 : f32
    %14 = vector.broadcast %cst_11 : f32 to vector<128x128xf32>
    %15 = arith.maximumf %13, %14 : vector<128x128xf32>
    %16 = arith.truncf %15 : vector<128x128xf32> to vector<128x128xbf16>
    %c0_12 = arith.constant 0 : index
    %c0_13 = arith.constant 0 : index
    %17 = vector.load %arg6[%c0_12, %c0_13] : memref<128x128xbf16, #tpu.memory_space<vmem>>, vector<128x128xbf16>
    %c0_14 = arith.constant 0 : index
    %c0_15 = arith.constant 0 : index
    %18 = vector.load %arg7[%c0_14, %c0_15] : memref<1x128xf32, #tpu.memory_space<vmem>>, vector<1x128xf32>
    %cst_16 = arith.constant dense<0.000000e+00> : vector<128x128xf32>
    %19 = tpu.matmul %16, %17, %cst_16 {dimension_numbers = #tpu.dot_dimension_numbers<[1], [0], [0], [1], [0, 0, 1, 1], [], []>} : vector<128x128xbf16>, vector<128x128xbf16>, vector<128x128xf32> -> vector<128x128xf32>
    %20 = vector.broadcast %18 : vector<1x128xf32> to vector<128x128xf32>
    %21 = arith.addf %19, %20 : vector<128x128xf32>
    %cst_17 = arith.constant dense<0xFF800000> : vector<128xf32>
    %22 = vector.multi_reduction <maximumf>, %21, %cst_17 [1] : vector<128x128xf32> to vector<128xf32>
    %23 = vector.shape_cast %22 : vector<128xf32> to vector<128x1xf32>
    %24 = vector.broadcast %23 : vector<128x1xf32> to vector<128x128xf32>
    %25 = arith.subf %21, %24 : vector<128x128xf32>
    %26 = math.exp %25 : vector<128x128xf32>
    %cst_18 = arith.constant dense<0.000000e+00> : vector<128xf32>
    %27 = vector.multi_reduction <add>, %26, %cst_18 [1] : vector<128x128xf32> to vector<128xf32>
    %28 = vector.shape_cast %27 : vector<128xf32> to vector<128x1xf32>
    %29 = math.log %28 : vector<128x1xf32>
    %30 = vector.broadcast %29 : vector<128x1xf32> to vector<128x128xf32>
    %31 = arith.subf %25, %30 : vector<128x128xf32>
    %c0_19 = arith.constant 0 : index
    %c0_20 = arith.constant 0 : index
    %32 = vector.load %arg8[%c0_19, %c0_20] : memref<128x128xf32, #tpu.memory_space<vmem>>, vector<128x128xf32>
    tpu.vector_store %arg8[%c0_19, %c0_20], %31 {strides = array<i32>} : memref<128x128xf32, #tpu.memory_space<vmem>>, vector<128x128xf32>,
    return
  }
  func.func @transform_0(%arg0: i32) -> (i32, i32) {
    %c0_i32 = arith.constant 0 : i32
    %c0_i32_0 = arith.constant 0 : i32
    return %arg0, %c0_i32 : i32, i32
  }
  func.func @transform_1(%arg0: i32) -> (i32, i32) {
    %c0_i32 = arith.constant 0 : i32
    %c0_i32_0 = arith.constant 0 : i32
    %c0_i32_1 = arith.constant 0 : i32
    return %c0_i32, %c0_i32_0 : i32, i32
  }
  func.func @transform_2(%arg0: i32) -> (i32, i32) {
    %c0_i32 = arith.constant 0 : i32
    %c0_i32_0 = arith.constant 0 : i32
    %c0_i32_1 = arith.constant 0 : i32
    return %c0_i32, %c0_i32_0 : i32, i32
  }
  func.func @transform_3(%arg0: i32) -> (i32, i32) {
    %c0_i32 = arith.constant 0 : i32
    %c0_i32_0 = arith.constant 0 : i32
    %c0_i32_1 = arith.constant 0 : i32
    return %c0_i32, %c0_i32_0 : i32, i32
  }
  func.func @transform_4(%arg0: i32) -> (i32, i32) {
    %c0_i32 = arith.constant 0 : i32
    %c0_i32_0 = arith.constant 0 : i32
    %c0_i32_1 = arith.constant 0 : i32
    return %c0_i32, %c0_i32_0 : i32, i32
  }
  func.func @transform_5(%arg0: i32) -> (i32, i32) {
    %c0_i32 = arith.constant 0 : i32
    %c0_i32_0 = arith.constant 0 : i32
    %c0_i32_1 = arith.constant 0 : i32
    return %c0_i32, %c0_i32_0 : i32, i32
  }
  func.func @transform_6(%arg0: i32) -> (i32, i32) {
    %c0_i32 = arith.constant 0 : i32
    %c0_i32_0 = arith.constant 0 : i32
    %c0_i32_1 = arith.constant 0 : i32
    return %c0_i32, %c0_i32_0 : i32, i32
  }
  func.func @transform_7(%arg0: i32) -> (i32, i32) {
    %c0_i32 = arith.constant 0 : i32
    %c0_i32_0 = arith.constant 0 : i32
    return %arg0, %c0_i32 : i32, i32
  }
}

</mosaic_0001>

<llo_original>
// kernel: tpu_custom_call.1
$region0: #{tpu_custom_call.1}
  #allocation0 [shape = 'u32[]', space=smem, size = 0x4, offset = 0x4, fixed_abs, tag = 'smem constant byte address 0x4 - core index']
  #allocation1 [shape = 'u32[72,128]{1,0:T(1,128)}', space=vmem, size = 0x9000, scoped, tag = 'internal scratch']
  %s0 = inlined_call_operand.vmem [shape: bf16[512,64], index: 0, kind: input, shape index: {}]
  %s1 = inlined_call_operand.vmem [shape: bf16[64,128], index: 1, kind: input, shape index: {}]
  %s2 = inlined_call_operand.vmem [shape: f32[1,128], index: 2, kind: input, shape index: {}]
  %s3 = inlined_call_operand.vmem [shape: bf16[128,128], index: 3, kind: input, shape index: {}]
  %s4 = inlined_call_operand.vmem [shape: f32[1,128], index: 4, kind: input, shape index: {}]
  %s5 = inlined_call_operand.vmem [shape: bf16[128,128], index: 5, kind: input, shape index: {}]
  %s6 = inlined_call_operand.vmem [shape: f32[1,128], index: 6, kind: input, shape index: {}]
  %s7 = inlined_call_operand.hbm [shape: f32[512,128], index: 7, kind: output, shape index: {}]
  %s8 = sld [smem:[#allocation0]]
  $region61: #{tpu_custom_call.1} parent=0
    _
  %s10 = ssub.s32 1, %s8
  %s11 = scalar_select 0, %s10, %s8
  $region1: #{tpu_custom_call.1} parent=0
    #allocation2 [shape = 'u8[131072]{0}', space=vmem, size = 0x20000, scoped, tag = 'output window, operand 0']
    #allocation3 [shape = 's32[2]{0}', space=sflag, size = 0x8, scoped, tag = 'scoped memory for tpu_custom_call.1']
    %12 = vsyncpa [#allocation3], 0
    %s13 = scalar_lea.sflag [#allocation3], 1
    %14 = vsyncpa %s13, 0
    loop: start=0, step=1, limit=6
    $region2: #{tpu_custom_call.1} parent=1 // loop_pre_header
      _
    $region3: #{tpu_custom_call.1} parent=1 // loop_header
      %s16 = sphi 0, %s20
      %p17 = scmp.ge.s32.totalorder %s16, 6
      %s26 = sphi 0, %s28
      %s29 = sphi 0, %s26
      %s30 = sphi 0, %s29
      %s46 = sphi 0, %s30
      %s50 = sphi 0, %s50
      %s52 = sphi 0, %s50
      %s53 = sphi 0, %s52
      %s67 = sphi 0, %s53
      %s71 = sphi 0, %s71
      %s73 = sphi 0, %s71
      %s74 = sphi 0, %s73
      %s88 = sphi 0, %s74
      %s92 = sphi 0, %s92
      %s94 = sphi 0, %s92
      %s95 = sphi 0, %s94
      %s109 = sphi 0, %s95
      %s113 = sphi 0, %s113
      %s115 = sphi 0, %s113
      %s116 = sphi 0, %s115
      %s130 = sphi 0, %s116
      %s134 = sphi 0, %s134
      %s136 = sphi 0, %s134
      %s137 = sphi 0, %s136
      %s151 = sphi 0, %s137
      %s155 = sphi 0, %s155
      %s157 = sphi 0, %s155
      %s158 = sphi 0, %s157
      %s172 = sphi 0, %s158
      %s178 = sphi 0, %s180
      %s181 = sphi 0, %s178
      %s182 = sphi 0, %s181
      %s198 = sphi 0, %s182
    $region4: #{tpu_custom_call.1} parent=1 // loop_header_branch
      %19 = sbr.rel (%p17) target = $region8
    $region5: #{tpu_custom_call.1} parent=1 // loop_body
      %s21 = ssub.s32 %s16, 1
      %s22 = ssub.s32 %s16, 2
      %s23 = sadd.s32 %s16, 1
      %s24 = ssub.s32 %s16, %s23
      %p25 = scmp.eq.s32.totalorder %s24, 0
      %s27 = sadd.s32 %s26, 1
      %s28 = scalar_select %p25, %s26, %s27
      %p31 = pneg %p25
      %p32 = scmp.eq.s32.totalorder %s16, 3
      %p33 = por %p31, %p32
      %p34 = scmp.ne.s32.totalorder %s26, %s29
      %p35 = scmp.eq.s32.totalorder %s16, 0
      %p36 = por %p34, %p35
      %p37 = scmp.ne.s32.totalorder %s26, %s29
      %p38 = scmp.eq.s32.totalorder %s21, 3
      %p39 = por %p37, %p38
      %p40 = scmp.ne.s32.totalorder %s29, %s30
      %p41 = scmp.eq.s32.totalorder %s21, 0
      %p42 = por %p40, %p41
      %p43 = scmp.ne.s32.totalorder %s29, %s30
      %p44 = scmp.eq.s32.totalorder %s22, 3
      %p45 = por %p43, %p44
      %p47 = scmp.ne.s32.totalorder %s30, %s46
      %p48 = scmp.eq.s32.totalorder %s22, 0
      %p49 = por %p47, %p48
      %s51 = sadd.s32 %s50, 1
      %p54 = scmp.eq.s32.totalorder %s16, 3
      %p55 = scmp.ne.s32.totalorder %s50, %s52
      %p56 = scmp.eq.s32.totalorder %s16, 0
      %p57 = por %p55, %p56
      %p58 = scmp.ne.s32.totalorder %s50, %s52
      %p59 = scmp.eq.s32.totalorder %s21, 3
      %p60 = por %p58, %p59
      %p61 = scmp.ne.s32.totalorder %s52, %s53
      %p62 = scmp.eq.s32.totalorder %s21, 0
      %p63 = por %p61, %p62
      %p64 = scmp.ne.s32.totalorder %s52, %s53
      %p65 = scmp.eq.s32.totalorder %s22, 3
      %p66 = por %p64, %p65
      %p68 = scmp.ne.s32.totalorder %s53, %s67
      %p69 = scmp.eq.s32.totalorder %s22, 0
      %p70 = por %p68, %p69
      %s72 = sadd.s32 %s71, 1
      %p75 = scmp.eq.s32.totalorder %s16, 3
      %p76 = scmp.ne.s32.totalorder %s71, %s73
      %p77 = scmp.eq.s32.totalorder %s16, 0
      %p78 = por %p76, %p77
      %p79 = scmp.ne.s32.totalorder %s71, %s73
      %p80 = scmp.eq.s32.totalorder %s21, 3
      %p81 = por %p79, %p80
      %p82 = scmp.ne.s32.totalorder %s73, %s74
      %p83 = scmp.eq.s32.totalorder %s21, 0
      %p84 = por %p82, %p83
      %p85 = scmp.ne.s32.totalorder %s73, %s74
      %p86 = scmp.eq.s32.totalorder %s22, 3
      %p87 = por %p85, %p86
      %p89 = scmp.ne.s32.totalorder %s74, %s88
      %p90 = scmp.eq.s32.totalorder %s22, 0
      %p91 = por %p89, %p90
      %s93 = sadd.s32 %s92, 1
      %p96 = scmp.eq.s32.totalorder %s16, 3
      %p97 = scmp.ne.s32.totalorder %s92, %s94
      %p98 = scmp.eq.s32.totalorder %s16, 0
      %p99 = por %p97, %p98
      %p100 = scmp.ne.s32.totalorder %s92, %s94
      %p101 = scmp.eq.s32.totalorder %s21, 3
      %p102 = por %p100, %p101
      %p103 = scmp.ne.s32.totalorder %s94, %s95
      %p104 = scmp.eq.s32.totalorder %s21, 0
      %p105 = por %p103, %p104
      %p106 = scmp.ne.s32.totalorder %s94, %s95
      %p107 = scmp.eq.s32.totalorder %s22, 3
      %p108 = por %p106, %p107
      %p110 = scmp.ne.s32.totalorder %s95, %s109
      %p111 = scmp.eq.s32.totalorder %s22, 0
      %p112 = por %p110, %p111
      %s114 = sadd.s32 %s113, 1
      %p117 = scmp.eq.s32.totalorder %s16, 3
      %p118 = scmp.ne.s32.totalorder %s113, %s115
      %p119 = scmp.eq.s32.totalorder %s16, 0
      %p120 = por %p118, %p119
      %p121 = scmp.ne.s32.totalorder %s113, %s115
      %p122 = scmp.eq.s32.totalorder %s21, 3
      %p123 = por %p121, %p122
      %p124 = scmp.ne.s32.totalorder %s115, %s116
      %p125 = scmp.eq.s32.totalorder %s21, 0
      %p126 = por %p124, %p125
      %p127 = scmp.ne.s32.totalorder %s115, %s116
      %p128 = scmp.eq.s32.totalorder %s22, 3
      %p129 = por %p127, %p128
      %p131 = scmp.ne.s32.totalorder %s116, %s130
      %p132 = scmp.eq.s32.totalorder %s22, 0
      %p133 = por %p131, %p132
      %s135 = sadd.s32 %s134, 1
      %p138 = scmp.eq.s32.totalorder %s16, 3
      %p139 = scmp.ne.s32.totalorder %s134, %s136
      %p140 = scmp.eq.s32.totalorder %s16, 0
      %p141 = por %p139, %p140
      %p142 = scmp.ne.s32.totalorder %s134, %s136
      %p143 = scmp.eq.s32.totalorder %s21, 3
      %p144 = por %p142, %p143
      %p145 = scmp.ne.s32.totalorder %s136, %s137
      %p146 = scmp.eq.s32.totalorder %s21, 0
      %p147 = por %p145, %p146
      %p148 = scmp.ne.s32.totalorder %s136, %s137
      %p149 = scmp.eq.s32.totalorder %s22, 3
      %p150 = por %p148, %p149
      %p152 = scmp.ne.s32.totalorder %s137, %s151
      %p153 = scmp.eq.s32.totalorder %s22, 0
      %p154 = por %p152, %p153
      %s156 = sadd.s32 %s155, 1
      %p159 = scmp.eq.s32.totalorder %s16, 3
      %p160 = scmp.ne.s32.totalorder %s155, %s157
      %p161 = scmp.eq.s32.totalorder %s16, 0
      %p162 = por %p160, %p161
      %p163 = scmp.ne.s32.totalorder %s155, %s157
      %p164 = scmp.eq.s32.totalorder %s21, 3
      %p165 = por %p163, %p164
      %p166 = scmp.ne.s32.totalorder %s157, %s158
      %p167 = scmp.eq.s32.totalorder %s21, 0
      %p168 = por %p166, %p167
      %p169 = scmp.ne.s32.totalorder %s157, %s158
      %p170 = scmp.eq.s32.totalorder %s22, 3
      %p171 = por %p169, %p170
      %p173 = scmp.ne.s32.totalorder %s158, %s172
      %p174 = scmp.eq.s32.totalorder %s22, 0
      %p175 = por %p173, %p174
      %s176 = ssub.s32 %s16, %s23
      %p177 = scmp.eq.s32.totalorder %s176, 0
      %s179 = sadd.s32 %s178, 1
      %s180 = scalar_select %p177, %s178, %s179
      %p183 = pneg %p177
      %p184 = scmp.eq.s32.totalorder %s16, 3
      %p185 = por %p183, %p184
      %p186 = scmp.ne.s32.totalorder %s178, %s181
      %p187 = scmp.eq.s32.totalorder %s16, 0
      %p188 = por %p186, %p187
      %p189 = scmp.ne.s32.totalorder %s178, %s181
      %p190 = scmp.eq.s32.totalorder %s21, 3
      %p191 = por %p189, %p190
      %p192 = scmp.ne.s32.totalorder %s181, %s182
      %p193 = scmp.eq.s32.totalorder %s21, 0
      %p194 = por %p192, %p193
      %p195 = scmp.ne.s32.totalorder %s181, %s182
      %p196 = scmp.eq.s32.totalorder %s22, 3
      %p197 = por %p195, %p196
      %p199 = scmp.ne.s32.totalorder %s182, %s198
      %p200 = scmp.eq.s32.totalorder %s22, 0
      %p201 = por %p199, %p200
      %p202 = scmp.le.s32.totalorder 1, %s16
      %p203 = scmp.lt.s32.totalorder %s16, 5
      %p204 = pnand %p202, %p203
      %p205 = pneg %p204
      // Predicated region
      $region9: #{tpu_custom_call.1} parent=5 // pred_check
        _
      $region10: #{tpu_custom_call.1} parent=5 // pred_check_branch
        %207 = sbr.rel (%p204) target = $region12
      $region11: #{tpu_custom_call.1} parent=5 // pred_region
        %s208 = ssub.s32 %s16, 1
        // Predicated region
        $region13: #{tpu_custom_call.1} parent=11 // pred_check
          %p209 = pneg %p63
        $region14: #{tpu_custom_call.1} parent=11 // pred_check_branch
          %211 = sbr.rel (%p209) target = $region16
        $region15: #{tpu_custom_call.1} parent=11 // pred_region
          _
        $region16: #{tpu_custom_call.1} parent=11 // pred_fallthru
          _
        // Predicated region
        $region17: #{tpu_custom_call.1} parent=11 // pred_check
          %p212 = pneg %p84
        $region18: #{tpu_custom_call.1} parent=11 // pred_check_branch
          %214 = sbr.rel (%p212) target = $region20
        $region19: #{tpu_custom_call.1} parent=11 // pred_region
          _
        $region20: #{tpu_custom_call.1} parent=11 // pred_fallthru
          _
        // Predicated region
        $region21: #{tpu_custom_call.1} parent=11 // pred_check
          %p215 = pneg %p105
        $region22: #{tpu_custom_call.1} parent=11 // pred_check_branch
          %217 = sbr.rel (%p215) target = $region24
        $region23: #{tpu_custom_call.1} parent=11 // pred_region
          _
        $region24: #{tpu_custom_call.1} parent=11 // pred_fallthru
          _
        // Predicated region
        $region25: #{tpu_custom_call.1} parent=11 // pred_check
          %p218 = pneg %p126
        $region26: #{tpu_custom_call.1} parent=11 // pred_check_branch
          %220 = sbr.rel (%p218) target = $region28
        $region27: #{tpu_custom_call.1} parent=11 // pred_region
          _
        $region28: #{tpu_custom_call.1} parent=11 // pred_fallthru
          _
        // Predicated region
        $region29: #{tpu_custom_call.1} parent=11 // pred_check
          %p221 = pneg %p147
        $region30: #{tpu_custom_call.1} parent=11 // pred_check_branch
          %223 = sbr.rel (%p221) target = $region32
        $region31: #{tpu_custom_call.1} parent=11 // pred_region
          _
        $region32: #{tpu_custom_call.1} parent=11 // pred_fallthru
          _
        // Predicated region
        $region33: #{tpu_custom_call.1} parent=11 // pred_check
          %p224 = pneg %p168
        $region34: #{tpu_custom_call.1} parent=11 // pred_check_branch
          %226 = sbr.rel (%p224) target = $region36
        $region35: #{tpu_custom_call.1} parent=11 // pred_region
          _
        $region36: #{tpu_custom_call.1} parent=11 // pred_fallthru
          _
      $region12: #{tpu_custom_call.1} parent=5 // pred_fallthru
        _
      %p227 = scmp.lt.s32.totalorder %s16, 4
      // Predicated region
      $region37: #{tpu_custom_call.1} parent=5 // pred_check
        %p228 = pneg %p227
      $region38: #{tpu_custom_call.1} parent=5 // pred_check_branch
        %230 = sbr.rel (%p228) target = $region40
      $region39: #{tpu_custom_call.1} parent=5 // pred_region
        // Predicated region
        $region41: #{tpu_custom_call.1} parent=39 // pred_check
          %p231 = pneg %p36
        $region42: #{tpu_custom_call.1} parent=39 // pred_check_branch
          %233 = sbr.rel (%p231) target = $region44
        $region43: #{tpu_custom_call.1} parent=39 // pred_region
          %s234 = smul.u32 16, %s16
          %p235 = scmp.lt.s32.totalorder %s234, 63
          %s236 = scalar_select %p235, %s234, 63
          %s237 = smul.addr %s236, 4
          %s238 = scalar_lea.vmem %s0, %s237
          %s239 = smul.u32 16, %s16
        $region44: #{tpu_custom_call.1} parent=39 // pred_fallthru
          _
      $region40: #{tpu_custom_call.1} parent=5 // pred_fallthru
        _
      %p240 = scmp.le.s32.totalorder 1, %s16
      %p241 = scmp.lt.s32.totalorder %s16, 5
      %p242 = pnand %p240, %p241
      %p243 = pneg %p242
      // Predicated region
      $region45: #{tpu_custom_call.1} parent=5 // pred_check
        _
      $region46: #{tpu_custom_call.1} parent=5 // pred_check_branch
        %245 = sbr.rel (%p242) target = $region48
      $region47: #{tpu_custom_call.1} parent=5 // pred_region
        %s246 = ssub.s32 %s16, 1
        %s247 = smul.u32 16, %s21
        %p248 = scmp.lt.s32.totalorder %s247, 63
        %s249 = scalar_select %p248, %s247, 63
        %s250 = smul.addr %s249, 4
        %s251 = scalar_lea.vmem %s0, %s250
        %p252 = pneg %p42
        %p253 = pneg %p39
        %p254 = pneg %p63
        %p255 = pneg %p60
        %p256 = pneg %p84
        %p257 = pneg %p81
        %p258 = pneg %p105
        %p259 = pneg %p102
        %p260 = pneg %p126
        %p261 = pneg %p123
        %p262 = pneg %p147
        %p263 = pneg %p144
        %p264 = pneg %p168
        %p265 = pneg %p165
        %p266 = pneg %p194
        %p267 = pneg %p191
        %s268 = sand.u32 %s181, 1
        %s269 = scalar_lea.sflag [#allocation3], %s268
        %s270 = sand.u32 %s181, 1
        %s271 = smul.addr %s270, 128
        %s272 = scalar_lea.vmem [#allocation2], %s271
        %s273 = smul.u32 16, %s21
        %p274 = scmp.lt.s32.totalorder %s273, 63
        %s275 = scalar_select %p274, %s273, 63
        %s276 = smul.addr %s275, 4
        %s277 = scalar_lea.vmem %s0, %s276
        %s278 = smul.u32 16, %s21
        %s279 = smul.u32 16, %s21
        %v281 = vld [vmem:[%s277] sm:$0xf]
        %v282 = vld [vmem:[%s277 + $0x4] sm:$0xf]
        %v283 = vld [vmem:[%s277 + $0x8] sm:$0xf]
        %v284 = vld [vmem:[%s277 + $0xc] sm:$0xf]
        %v285 = vld [vmem:[%s277 + $0x10] sm:$0xf]
        %v286 = vld [vmem:[%s277 + $0x14] sm:$0xf]
        %v287 = vld [vmem:[%s277 + $0x18] sm:$0xf]
        %v288 = vld [vmem:[%s277 + $0x1c] sm:$0xf]
        %v289 = vld [vmem:[%s277 + $0x20] sm:$0xf]
        %v290 = vld [vmem:[%s277 + $0x24] sm:$0xf]
        %v291 = vld [vmem:[%s277 + $0x28] sm:$0xf]
        %v292 = vld [vmem:[%s277 + $0x2c] sm:$0xf]
        %v293 = vld [vmem:[%s277 + $0x30] sm:$0xf]
        %v294 = vld [vmem:[%s277 + $0x34] sm:$0xf]
        %v295 = vld [vmem:[%s277 + $0x38] sm:$0xf]
        %v296 = vld [vmem:[%s277 + $0x3c] sm:$0xf]
        %v297 = vld [vmem:[%s1] sm:$0xf]
        %v298 = vld [vmem:[%s1 + $0x4] sm:$0xf]
        %v299 = vld [vmem:[%s1 + $0x8] sm:$0xf]
        %v300 = vld [vmem:[%s1 + $0xc] sm:$0xf]
        %v301 = vld [vmem:[%s1 + $0x10] sm:$0xf]
        %v302 = vld [vmem:[%s1 + $0x14] sm:$0xf]
        %v303 = vld [vmem:[%s1 + $0x18] sm:$0xf]
        %v304 = vld [vmem:[%s1 + $0x1c] sm:$0xf]
        %v305 = vld [vmem:[%s2] sm:$0x1]
        %v307 = vperm.slane %v305, 0
        %v325 = vunpack.c.l.b16 %v281
        %v326 = vunpack.c.l.b16 %v282
        %v327 = vunpack.c.l.b16 %v283
        %v328 = vunpack.c.l.b16 %v284
        %v329 = vunpack.c.l.b16 %v285
        %v330 = vunpack.c.l.b16 %v286
        %v331 = vunpack.c.l.b16 %v287
        %v332 = vunpack.c.l.b16 %v288
        %v333 = vunpack.c.l.b16 %v289
        %v334 = vunpack.c.l.b16 %v290
        %v335 = vunpack.c.l.b16 %v291
        %v336 = vunpack.c.l.b16 %v292
        %v337 = vunpack.c.l.b16 %v293
        %v338 = vunpack.c.l.b16 %v294
        %v339 = vunpack.c.l.b16 %v295
        %v340 = vunpack.c.l.b16 %v296
        %v341 = vpack.c.b16 %v326, %v325
        %v342 = vpack.c.b16 %v328, %v327
        %v343 = vpack.c.b16 %v330, %v329
        %v344 = vpack.c.b16 %v332, %v331
        %v345 = vpack.c.b16 %v334, %v333
        %v346 = vpack.c.b16 %v336, %v335
        %v347 = vpack.c.b16 %v338, %v337
        %v348 = vpack.c.b16 %v340, %v339
        %v357 = vunpack.c.l.b16 %v297
        %v358 = vunpack.c.l.b16 %v298
        %v359 = vunpack.c.l.b16 %v299
        %v360 = vunpack.c.l.b16 %v300
        %v361 = vunpack.c.l.b16 %v301
        %v362 = vunpack.c.l.b16 %v302
        %v363 = vunpack.c.l.b16 %v303
        %v364 = vunpack.c.l.b16 %v304
        %v365 = vpack.c.b16 %v358, %v357
        %v366 = vpack.c.b16 %v360, %v359
        %v367 = vpack.c.b16 %v362, %v361
        %v368 = vpack.c.b16 %v364, %v363
        %vm373 = vcmask 523264
        %v375 = vsel %vm373, %v341, 0
        %v378 = vsel %vm373, %v342, 0
        %v381 = vsel %vm373, %v343, 0
        %v384 = vsel %vm373, %v344, 0
        %v387 = vsel %vm373, %v345, 0
        %v390 = vsel %vm373, %v346, 0
        %v393 = vsel %vm373, %v347, 0
        %v396 = vsel %vm373, %v348, 0
        %398 = vmatpush.bf16.msra.mxu0 0
        %399 = vmatpush.bf16.msra.mxu0 0
        %400 = vmatpush.bf16.msra.mxu0 0
        %401 = vmatpush.bf16.msra.mxu0 0
        %402 = vmatpush.bf16.msra.mxu0 %v368
        %403 = vmatpush.bf16.msra.mxu0 %v367
        %404 = vmatpush.bf16.msra.mxu0 %v366
        %405 = vmatpush.bf16.msra.mxu0 %v365
        %406 = vmatmul.bf16.gmra.mxu0 %v375
        %v407 = vpop.f32.mrf.mxu0
        %v408 = vadd.f32 %v307, %v407
        %v409 = vpop.f32.mrf.mxu0
        %v410 = vadd.f32 %v307, %v409
        %411 = vmatmul.bf16.gmra.mxu0 %v378
        %v412 = vpop.f32.mrf.mxu0
        %v413 = vadd.f32 %v307, %v412
        %v414 = vpop.f32.mrf.mxu0
        %v415 = vadd.f32 %v307, %v414
        %416 = vmatmul.bf16.gmra.mxu0 %v381
        %v417 = vpop.f32.mrf.mxu0
        %v418 = vadd.f32 %v307, %v417
        %v419 = vpop.f32.mrf.mxu0
        %v420 = vadd.f32 %v307, %v419
        %421 = vmatmul.bf16.gmra.mxu0 %v384
        %v422 = vpop.f32.mrf.mxu0
        %v423 = vadd.f32 %v307, %v422
        %v424 = vpop.f32.mrf.mxu0
        %v425 = vadd.f32 %v307, %v424
        %426 = vmatmul.bf16.gmra.mxu0 %v387
        %v427 = vpop.f32.mrf.mxu0
        %v428 = vadd.f32 %v307, %v427
        %v429 = vpop.f32.mrf.mxu0
        %v430 = vadd.f32 %v307, %v429
        %431 = vmatmul.bf16.gmra.mxu0 %v390
        %v432 = vpop.f32.mrf.mxu0
        %v433 = vadd.f32 %v307, %v432
        %v434 = vpop.f32.mrf.mxu0
        %v435 = vadd.f32 %v307, %v434
        %436 = vmatmul.bf16.gmra.mxu0 %v393
        %v437 = vpop.f32.mrf.mxu0
        %v438 = vadd.f32 %v307, %v437
        %v439 = vpop.f32.mrf.mxu0
        %v440 = vadd.f32 %v307, %v439
        %441 = vmatmul.bf16.gmra.mxu0 %v396
        %v442 = vpop.f32.mrf.mxu0
        %v443 = vadd.f32 %v307, %v442
        %v444 = vpop.f32.mrf.mxu0
        %v445 = vadd.f32 %v307, %v444
        %446 = vdwg.mxu0
        %v447 = vmax.f32 %v408, 0.0
        %v448 = vmax.f32 %v410, 0.0
        %v449 = vmax.f32 %v413, 0.0
        %v450 = vmax.f32 %v415, 0.0
        %v451 = vmax.f32 %v418, 0.0
        %v452 = vmax.f32 %v420, 0.0
        %v453 = vmax.f32 %v423, 0.0
        %v454 = vmax.f32 %v425, 0.0
        %v455 = vmax.f32 %v428, 0.0
        %v456 = vmax.f32 %v430, 0.0
        %v457 = vmax.f32 %v433, 0.0
        %v458 = vmax.f32 %v435, 0.0
        %v459 = vmax.f32 %v438, 0.0
        %v460 = vmax.f32 %v440, 0.0
        %v461 = vmax.f32 %v443, 0.0
        %v462 = vmax.f32 %v445, 0.0
        %v463 = vpack.c.bf16 %v448, %v447
        %v464 = vpack.c.bf16 %v450, %v449
        %v465 = vpack.c.bf16 %v452, %v451
        %v466 = vpack.c.bf16 %v454, %v453
        %v467 = vpack.c.bf16 %v456, %v455
        %v468 = vpack.c.bf16 %v458, %v457
        %v469 = vpack.c.bf16 %v460, %v459
        %v470 = vpack.c.bf16 %v462, %v461
        %v471 = vld [vmem:[%s3] sm:$0xf]
        %v472 = vld [vmem:[%s3 + $0x4] sm:$0xf]
        %v473 = vld [vmem:[%s3 + $0x8] sm:$0xf]
        %v474 = vld [vmem:[%s3 + $0xc] sm:$0xf]
        %v475 = vld [vmem:[%s3 + $0x10] sm:$0xf]
        %v476 = vld [vmem:[%s3 + $0x14] sm:$0xf]
        %v477 = vld [vmem:[%s3 + $0x18] sm:$0xf]
        %v478 = vld [vmem:[%s3 + $0x1c] sm:$0xf]
        %v479 = vld [vmem:[%s3 + $0x20] sm:$0xf]
        %v480 = vld [vmem:[%s3 + $0x24] sm:$0xf]
        %v481 = vld [vmem:[%s3 + $0x28] sm:$0xf]
        %v482 = vld [vmem:[%s3 + $0x2c] sm:$0xf]
        %v483 = vld [vmem:[%s3 + $0x30] sm:$0xf]
        %v484 = vld [vmem:[%s3 + $0x34] sm:$0xf]
        %v485 = vld [vmem:[%s3 + $0x38] sm:$0xf]
        %v486 = vld [vmem:[%s3 + $0x3c] sm:$0xf]
        %v487 = vld [vmem:[%s4] sm:$0x1]
        %v489 = vperm.slane %v487, 0
        %v507 = vunpack.c.l.b16 %v471
        %v508 = vunpack.c.l.b16 %v472
        %v509 = vunpack.c.l.b16 %v473
        %v510 = vunpack.c.l.b16 %v474
        %v511 = vunpack.c.l.b16 %v475
        %v512 = vunpack.c.l.b16 %v476
        %v513 = vunpack.c.l.b16 %v477
        %v514 = vunpack.c.l.b16 %v478
        %v515 = vunpack.c.l.b16 %v479
        %v516 = vunpack.c.l.b16 %v480
        %v517 = vunpack.c.l.b16 %v481
        %v518 = vunpack.c.l.b16 %v482
        %v519 = vunpack.c.l.b16 %v483
        %v520 = vunpack.c.l.b16 %v484
        %v521 = vunpack.c.l.b16 %v485
        %v522 = vunpack.c.l.b16 %v486
        %v523 = vpack.c.b16 %v508, %v507
        %v524 = vpack.c.b16 %v510, %v509
        %v525 = vpack.c.b16 %v512, %v511
        %v526 = vpack.c.b16 %v514, %v513
        %v527 = vpack.c.b16 %v516, %v515
        %v528 = vpack.c.b16 %v518, %v517
        %v529 = vpack.c.b16 %v520, %v519
        %v530 = vpack.c.b16 %v522, %v521
        %539 = vmatpush.bf16.msra.mxu0 %v530
        %540 = vmatpush.bf16.msra.mxu0 %v529
        %541 = vmatpush.bf16.msra.mxu0 %v528
        %542 = vmatpush.bf16.msra.mxu0 %v527
        %543 = vmatpush.bf16.msra.mxu0 %v526
        %544 = vmatpush.bf16.msra.mxu0 %v525
        %545 = vmatpush.bf16.msra.mxu0 %v524
        %546 = vmatpush.bf16.msra.mxu0 %v523
        %547 = vmatmul.bf16.gmra.mxu0 %v463
        %v548 = vpop.f32.mrf.mxu0
        %v549 = vadd.f32 %v489, %v548
        %v550 = vpop.f32.mrf.mxu0
        %v551 = vadd.f32 %v489, %v550
        %552 = vmatmul.bf16.gmra.mxu0 %v464
        %v553 = vpop.f32.mrf.mxu0
        %v554 = vadd.f32 %v489, %v553
        %v555 = vpop.f32.mrf.mxu0
        %v556 = vadd.f32 %v489, %v555
        %557 = vmatmul.bf16.gmra.mxu0 %v465
        %v558 = vpop.f32.mrf.mxu0
        %v559 = vadd.f32 %v489, %v558
        %v560 = vpop.f32.mrf.mxu0
        %v561 = vadd.f32 %v489, %v560
        %562 = vmatmul.bf16.gmra.mxu0 %v466
        %v563 = vpop.f32.mrf.mxu0
        %v564 = vadd.f32 %v489, %v563
        %v565 = vpop.f32.mrf.mxu0
        %v566 = vadd.f32 %v489, %v565
        %567 = vmatmul.bf16.gmra.mxu0 %v467
        %v568 = vpop.f32.mrf.mxu0
        %v569 = vadd.f32 %v489, %v568
        %v570 = vpop.f32.mrf.mxu0
        %v571 = vadd.f32 %v489, %v570
        %572 = vmatmul.bf16.gmra.mxu0 %v468
        %v573 = vpop.f32.mrf.mxu0
        %v574 = vadd.f32 %v489, %v573
        %v575 = vpop.f32.mrf.mxu0
        %v576 = vadd.f32 %v489, %v575
        %577 = vmatmul.bf16.gmra.mxu0 %v469
        %v578 = vpop.f32.mrf.mxu0
        %v579 = vadd.f32 %v489, %v578
        %v580 = vpop.f32.mrf.mxu0
        %v581 = vadd.f32 %v489, %v580
        %582 = vmatmul.bf16.gmra.mxu0 %v470
        %v583 = vpop.f32.mrf.mxu0
        %v584 = vadd.f32 %v489, %v583
        %v585 = vpop.f32.mrf.mxu0
        %v586 = vadd.f32 %v489, %v585
        %587 = vdwg.mxu0
        %v588 = vmax.f32 %v549, 0.0
        %v589 = vmax.f32 %v551, 0.0
        %v590 = vmax.f32 %v554, 0.0
        %v591 = vmax.f32 %v556, 0.0
        %v592 = vmax.f32 %v559, 0.0
        %v593 = vmax.f32 %v561, 0.0
        %v594 = vmax.f32 %v564, 0.0
        %v595 = vmax.f32 %v566, 0.0
        %v596 = vmax.f32 %v569, 0.0
        %v597 = vmax.f32 %v571, 0.0
        %v598 = vmax.f32 %v574, 0.0
        %v599 = vmax.f32 %v576, 0.0
        %v600 = vmax.f32 %v579, 0.0
        %v601 = vmax.f32 %v581, 0.0
        %v602 = vmax.f32 %v584, 0.0
        %v603 = vmax.f32 %v586, 0.0
        %v604 = vpack.c.bf16 %v589, %v588
        %v605 = vpack.c.bf16 %v591, %v590
        %v606 = vpack.c.bf16 %v593, %v592
        %v607 = vpack.c.bf16 %v595, %v594
        %v608 = vpack.c.bf16 %v597, %v596
        %v609 = vpack.c.bf16 %v599, %v598
        %v610 = vpack.c.bf16 %v601, %v600
        %v611 = vpack.c.bf16 %v603, %v602
        %v612 = vld [vmem:[%s5] sm:$0xf]
        %v613 = vld [vmem:[%s5 + $0x4] sm:$0xf]
        %v614 = vld [vmem:[%s5 + $0x8] sm:$0xf]
        %v615 = vld [vmem:[%s5 + $0xc] sm:$0xf]
        %v616 = vld [vmem:[%s5 + $0x10] sm:$0xf]
        %v617 = vld [vmem:[%s5 + $0x14] sm:$0xf]
        %v618 = vld [vmem:[%s5 + $0x18] sm:$0xf]
        %v619 = vld [vmem:[%s5 + $0x1c] sm:$0xf]
        %v620 = vld [vmem:[%s5 + $0x20] sm:$0xf]
        %v621 = vld [vmem:[%s5 + $0x24] sm:$0xf]
        %v622 = vld [vmem:[%s5 + $0x28] sm:$0xf]
        %v623 = vld [vmem:[%s5 + $0x2c] sm:$0xf]
        %v624 = vld [vmem:[%s5 + $0x30] sm:$0xf]
        %v625 = vld [vmem:[%s5 + $0x34] sm:$0xf]
        %v626 = vld [vmem:[%s5 + $0x38] sm:$0xf]
        %v627 = vld [vmem:[%s5 + $0x3c] sm:$0xf]
        %v628 = vld [vmem:[%s6] sm:$0x1]
        %v630 = vperm.slane %v628, 0
        %v648 = vunpack.c.l.b16 %v612
        %v649 = vunpack.c.l.b16 %v613
        %v650 = vunpack.c.l.b16 %v614
        %v651 = vunpack.c.l.b16 %v615
        %v652 = vunpack.c.l.b16 %v616
        %v653 = vunpack.c.l.b16 %v617
        %v654 = vunpack.c.l.b16 %v618
        %v655 = vunpack.c.l.b16 %v619
        %v656 = vunpack.c.l.b16 %v620
        %v657 = vunpack.c.l.b16 %v621
        %v658 = vunpack.c.l.b16 %v622
        %v659 = vunpack.c.l.b16 %v623
        %v660 = vunpack.c.l.b16 %v624
        %v661 = vunpack.c.l.b16 %v625
        %v662 = vunpack.c.l.b16 %v626
        %v663 = vunpack.c.l.b16 %v627
        %v664 = vpack.c.b16 %v649, %v648
        %v665 = vpack.c.b16 %v651, %v650
        %v666 = vpack.c.b16 %v653, %v652
        %v667 = vpack.c.b16 %v655, %v654
        %v668 = vpack.c.b16 %v657, %v656
        %v669 = vpack.c.b16 %v659, %v658
        %v670 = vpack.c.b16 %v661, %v660
        %v671 = vpack.c.b16 %v663, %v662
        %680 = vmatpush.bf16.msra.mxu0 %v671
        %681 = vmatpush.bf16.msra.mxu0 %v670
        %682 = vmatpush.bf16.msra.mxu0 %v669
        %683 = vmatpush.bf16.msra.mxu0 %v668
        %684 = vmatpush.bf16.msra.mxu0 %v667
        %685 = vmatpush.bf16.msra.mxu0 %v666
        %686 = vmatpush.bf16.msra.mxu0 %v665
        %687 = vmatpush.bf16.msra.mxu0 %v664
        %688 = vmatmul.bf16.gmra.mxu0 %v604
        %v689 = vpop.f32.mrf.mxu0
        %v690 = vadd.f32 %v630, %v689
        %v691 = vpop.f32.mrf.mxu0
        %v692 = vadd.f32 %v630, %v691
        %693 = vmatmul.bf16.gmra.mxu0 %v605
        %v694 = vpop.f32.mrf.mxu0
        %v695 = vadd.f32 %v630, %v694
        %v696 = vpop.f32.mrf.mxu0
        %v697 = vadd.f32 %v630, %v696
        %698 = vmatmul.bf16.gmra.mxu0 %v606
        %v699 = vpop.f32.mrf.mxu0
        %v700 = vadd.f32 %v630, %v699
        %v701 = vpop.f32.mrf.mxu0
        %v702 = vadd.f32 %v630, %v701
        %703 = vmatmul.bf16.gmra.mxu0 %v607
        %v704 = vpop.f32.mrf.mxu0
        %v705 = vadd.f32 %v630, %v704
        %v706 = vpop.f32.mrf.mxu0
        %v707 = vadd.f32 %v630, %v706
        %708 = vmatmul.bf16.gmra.mxu0 %v608
        %v709 = vpop.f32.mrf.mxu0
        %v710 = vadd.f32 %v630, %v709
        %v711 = vpop.f32.mrf.mxu0
        %v712 = vadd.f32 %v630, %v711
        %713 = vmatmul.bf16.gmra.mxu0 %v609
        %v714 = vpop.f32.mrf.mxu0
        %v715 = vadd.f32 %v630, %v714
        %v716 = vpop.f32.mrf.mxu0
        %v717 = vadd.f32 %v630, %v716
        %718 = vmatmul.bf16.gmra.mxu0 %v610
        %v719 = vpop.f32.mrf.mxu0
        %v720 = vadd.f32 %v630, %v719
        %v721 = vpop.f32.mrf.mxu0
        %v722 = vadd.f32 %v630, %v721
        %723 = vmatmul.bf16.gmra.mxu0 %v611
        %v724 = vpop.f32.mrf.mxu0
        %v725 = vadd.f32 %v630, %v724
        %v726 = vpop.f32.mrf.mxu0
        %v727 = vadd.f32 %v630, %v726
        %728 = vdwg.mxu0
        %729 = vmax.xlane.f32.xlu0 %v690
        %v730 = vpop.xlane.xlu0 %729
        %731 = vmax.xlane.f32.xlu0 %v692
        %v732 = vpop.xlane.xlu0 %731
        %733 = vmax.xlane.f32.xlu0 %v695
        %v734 = vpop.xlane.xlu0 %733
        %735 = vmax.xlane.f32.xlu0 %v697
        %v736 = vpop.xlane.xlu0 %735
        %737 = vmax.xlane.f32.xlu0 %v700
        %v738 = vpop.xlane.xlu0 %737
        %739 = vmax.xlane.f32.xlu0 %v702
        %v740 = vpop.xlane.xlu0 %739
        %741 = vmax.xlane.f32.xlu0 %v705
        %v742 = vpop.xlane.xlu0 %741
        %743 = vmax.xlane.f32.xlu0 %v707
        %v744 = vpop.xlane.xlu0 %743
        %745 = vmax.xlane.f32.xlu0 %v710
        %v746 = vpop.xlane.xlu0 %745
        %747 = vmax.xlane.f32.xlu0 %v712
        %v748 = vpop.xlane.xlu0 %747
        %749 = vmax.xlane.f32.xlu0 %v715
        %v750 = vpop.xlane.xlu0 %749
        %751 = vmax.xlane.f32.xlu0 %v717
        %v752 = vpop.xlane.xlu0 %751
        %753 = vmax.xlane.f32.xlu0 %v720
        %v754 = vpop.xlane.xlu0 %753
        %755 = vmax.xlane.f32.xlu0 %v722
        %v756 = vpop.xlane.xlu0 %755
        %757 = vmax.xlane.f32.xlu0 %v725
        %v758 = vpop.xlane.xlu0 %757
        %759 = vmax.xlane.f32.xlu0 %v727
        %v760 = vpop.xlane.xlu0 %759
        %v761 = vsub.f32 %v690, %v730
        %v762 = vsub.f32 %v692, %v732
        %v763 = vsub.f32 %v695, %v734
        %v764 = vsub.f32 %v697, %v736
        %v765 = vsub.f32 %v700, %v738
        %v766 = vsub.f32 %v702, %v740
        %v767 = vsub.f32 %v705, %v742
        %v768 = vsub.f32 %v707, %v744
        %v769 = vsub.f32 %v710, %v746
        %v770 = vsub.f32 %v712, %v748
        %v771 = vsub.f32 %v715, %v750
        %v772 = vsub.f32 %v717, %v752
        %v773 = vsub.f32 %v720, %v754
        %v774 = vsub.f32 %v722, %v756
        %v775 = vsub.f32 %v725, %v758
        %v776 = vsub.f32 %v727, %v760
        %v777 = vmul.f32 %v761, 1.442695
        %v778 = vpow.pop %v777
        %v779 = vmul.f32 %v762, 1.442695
        %v780 = vpow.pop %v779
        %v781 = vmul.f32 %v763, 1.442695
        %v782 = vpow.pop %v781
        %v783 = vmul.f32 %v764, 1.442695
        %v784 = vpow.pop %v783
        %v785 = vmul.f32 %v765, 1.442695
        %v786 = vpow.pop %v785
        %v787 = vmul.f32 %v766, 1.442695
        %v788 = vpow.pop %v787
        %v789 = vmul.f32 %v767, 1.442695
        %v790 = vpow.pop %v789
        %v791 = vmul.f32 %v768, 1.442695
        %v792 = vpow.pop %v791
        %v793 = vmul.f32 %v769, 1.442695
        %v794 = vpow.pop %v793
        %v795 = vmul.f32 %v770, 1.442695
        %v796 = vpow.pop %v795
        %v797 = vmul.f32 %v771, 1.442695
        %v798 = vpow.pop %v797
        %v799 = vmul.f32 %v772, 1.442695
        %v800 = vpow.pop %v799
        %v801 = vmul.f32 %v773, 1.442695
        %v802 = vpow.pop %v801
        %v803 = vmul.f32 %v774, 1.442695
        %v804 = vpow.pop %v803
        %v805 = vmul.f32 %v775, 1.442695
        %v806 = vpow.pop %v805
        %v807 = vmul.f32 %v776, 1.442695
        %v808 = vpow.pop %v807
        %809 = vadd.xlane.f32.xlu0 %v778
        %v810 = vpop.xlane.xlu0 %809
        %811 = vadd.xlane.f32.xlu0 %v780
        %v812 = vpop.xlane.xlu0 %811
        %813 = vadd.xlane.f32.xlu0 %v782
        %v814 = vpop.xlane.xlu0 %813
        %815 = vadd.xlane.f32.xlu0 %v784
        %v816 = vpop.xlane.xlu0 %815
        %817 = vadd.xlane.f32.xlu0 %v786
        %v818 = vpop.xlane.xlu0 %817
        %819 = vadd.xlane.f32.xlu0 %v788
        %v820 = vpop.xlane.xlu0 %819
        %821 = vadd.xlane.f32.xlu0 %v790
        %v822 = vpop.xlane.xlu0 %821
        %823 = vadd.xlane.f32.xlu0 %v792
        %v824 = vpop.xlane.xlu0 %823
        %825 = vadd.xlane.f32.xlu0 %v794
        %v826 = vpop.xlane.xlu0 %825
        %827 = vadd.xlane.f32.xlu0 %v796
        %v828 = vpop.xlane.xlu0 %827
        %829 = vadd.xlane.f32.xlu0 %v798
        %v830 = vpop.xlane.xlu0 %829
        %831 = vadd.xlane.f32.xlu0 %v800
        %v832 = vpop.xlane.xlu0 %831
        %833 = vadd.xlane.f32.xlu0 %v802
        %v834 = vpop.xlane.xlu0 %833
        %835 = vadd.xlane.f32.xlu0 %v804
        %v836 = vpop.xlane.xlu0 %835
        %837 = vadd.xlane.f32.xlu0 %v806
        %v838 = vpop.xlane.xlu0 %837
        %839 = vadd.xlane.f32.xlu0 %v808
        %v840 = vpop.xlane.xlu0 %839
        %v841 = vlog2.pop %v810
        %v842 = vmul.f32 %v841, 0.6931472
        %v843 = vlog2.pop %v812
        %v844 = vmul.f32 %v843, 0.6931472
        %v845 = vlog2.pop %v814
        %v846 = vmul.f32 %v845, 0.6931472
        %v847 = vlog2.pop %v816
        %v848 = vmul.f32 %v847, 0.6931472
        %v849 = vlog2.pop %v818
        %v850 = vmul.f32 %v849, 0.6931472
        %v851 = vlog2.pop %v820
        %v852 = vmul.f32 %v851, 0.6931472
        %v853 = vlog2.pop %v822
        %v854 = vmul.f32 %v853, 0.6931472
        %v855 = vlog2.pop %v824
        %v856 = vmul.f32 %v855, 0.6931472
        %v857 = vlog2.pop %v826
        %v858 = vmul.f32 %v857, 0.6931472
        %v859 = vlog2.pop %v828
        %v860 = vmul.f32 %v859, 0.6931472
        %v861 = vlog2.pop %v830
        %v862 = vmul.f32 %v861, 0.6931472
        %v863 = vlog2.pop %v832
        %v864 = vmul.f32 %v863, 0.6931472
        %v865 = vlog2.pop %v834
        %v866 = vmul.f32 %v865, 0.6931472
        %v867 = vlog2.pop %v836
        %v868 = vmul.f32 %v867, 0.6931472
        %v869 = vlog2.pop %v838
        %v870 = vmul.f32 %v869, 0.6931472
        %v871 = vlog2.pop %v840
        %v872 = vmul.f32 %v871, 0.6931472
        %v873 = vsub.f32 %v761, %v842
        %v874 = vsub.f32 %v762, %v844
        %v875 = vsub.f32 %v763, %v846
        %v876 = vsub.f32 %v764, %v848
        %v877 = vsub.f32 %v765, %v850
        %v878 = vsub.f32 %v766, %v852
        %v879 = vsub.f32 %v767, %v854
        %v880 = vsub.f32 %v768, %v856
        %v881 = vsub.f32 %v769, %v858
        %v882 = vsub.f32 %v770, %v860
        %v883 = vsub.f32 %v771, %v862
        %v884 = vsub.f32 %v772, %v864
        %v885 = vsub.f32 %v773, %v866
        %v886 = vsub.f32 %v774, %v868
        %v887 = vsub.f32 %v775, %v870
        %v888 = vsub.f32 %v776, %v872
        %889 = vst [vmem:[%s272] sm:$0xff] %v873
        %890 = vst [vmem:[%s272 + $0x8] sm:$0xff] %v874
        %891 = vst [vmem:[%s272 + $0x10] sm:$0xff] %v875
        %892 = vst [vmem:[%s272 + $0x18] sm:$0xff] %v876
        %893 = vst [vmem:[%s272 + $0x20] sm:$0xff] %v877
        %894 = vst [vmem:[%s272 + $0x28] sm:$0xff] %v878
        %895 = vst [vmem:[%s272 + $0x30] sm:$0xff] %v879
        %896 = vst [vmem:[%s272 + $0x38] sm:$0xff] %v880
        %897 = vst [vmem:[%s272 + $0x40] sm:$0xff] %v881
        %898 = vst [vmem:[%s272 + $0x48] sm:$0xff] %v882
        %899 = vst [vmem:[%s272 + $0x50] sm:$0xff] %v883
        %900 = vst [vmem:[%s272 + $0x58] sm:$0xff] %v884
        %901 = vst [vmem:[%s272 + $0x60] sm:$0xff] %v885
        %902 = vst [vmem:[%s272 + $0x68] sm:$0xff] %v886
        %903 = vst [vmem:[%s272 + $0x70] sm:$0xff] %v887
        %904 = vst [vmem:[%s272 + $0x78] sm:$0xff] %v888
        %s905 = sand.u32 %s181, 1
        %s906 = scalar_lea.sflag [#allocation3], %s905
        %s907 = sand.u32 %s181, 1
        %s908 = smul.addr %s907, 128
        %s909 = scalar_lea.vmem [#allocation2], %s908
        // Predicated region
        $region49: #{tpu_custom_call.1} parent=47 // pred_check
          %p910 = pneg %p191
        $region50: #{tpu_custom_call.1} parent=47 // pred_check_branch
          %912 = sbr.rel (%p910) target = $region52
        $region51: #{tpu_custom_call.1} parent=47 // pred_region
          %s913 = smul.u32 16, %s21
          %915 = vsyncadd %s906, 0
          %s916 = smul.addr %s913, 8
          %s917 = scalar_lea.hbm %s7, %s916
          %s918 = sshll.u32 %s909, 4
          %s919 = int_to_ptr.vmem [resolvable:$true] %s918
          %s920 = sshll.u32 %s917, 4
          %s921 = int_to_ptr.hbm [resolvable:$true] %s920
          %926 = dma.vmem_to_hbm [thread:$0]  %s919, 2048, %s921, %s906, 128, 128, 8
        $region52: #{tpu_custom_call.1} parent=47 // pred_fallthru
          _
      $region48: #{tpu_custom_call.1} parent=5 // pred_fallthru
        _
      %p927 = scmp.le.s32.totalorder 2, %s16
      // Predicated region
      $region53: #{tpu_custom_call.1} parent=5 // pred_check
        %p928 = pneg %p927
      $region54: #{tpu_custom_call.1} parent=5 // pred_check_branch
        %930 = sbr.rel (%p928) target = $region56
      $region55: #{tpu_custom_call.1} parent=5 // pred_region
        %s931 = ssub.s32 %s16, 2
        // Predicated region
        $region57: #{tpu_custom_call.1} parent=55 // pred_check
          %p932 = pneg %p197
        $region58: #{tpu_custom_call.1} parent=55 // pred_check_branch
          %934 = sbr.rel (%p932) target = $region60
        $region59: #{tpu_custom_call.1} parent=55 // pred_region
          %s935 = sand.u32 %s182, 1
          %s936 = scalar_lea.sflag [#allocation3], %s935
          %s937 = sand.u32 %s182, 1
          %s938 = smul.addr %s937, 128
          %s939 = scalar_lea.vmem [#allocation2], %s938
          %941 = dma.done %s936, 2048
        $region60: #{tpu_custom_call.1} parent=55 // pred_fallthru
          _
      $region56: #{tpu_custom_call.1} parent=5 // pred_fallthru
        _
    $region6: #{tpu_custom_call.1} parent=1 // loop_footer
      %s20 = sadd.s32 1, %s16
    $region7: #{tpu_custom_call.1} parent=1 // loop_footer_branch
      %15 = sbr.rel target = $region3
    $region8: #{tpu_custom_call.1} parent=1 // loop_exit
      _
    %942 = vsyncpa [#allocation3], 1
    %s943 = scalar_lea.sflag [#allocation3], 1
    %944 = vsyncpa %s943, 1

</llo_original>
